<compile_context>
chip_gen: v7x
topology: tpu7x:2x2x1
jax: 0.10.0
libtpu: 0.0.40
codegen_flags: <defaults>
</compile_context>

<pallas_src>
import functools

import jax
import jax.numpy as jnp
from jax.experimental import pallas as pl
from jax.experimental.pallas import tpu as pltpu

_LANE = 128
_SUBLANE = 8


def _round_up(a, b):
    return ((a + b - 1) // b) * b


def _round_down(a, b):
    return (a // b) * b


def _gap1d_kernel(x_ref, o_ref, acc_ref, *, inv_len, rem):
    """x_ref: (TR, TL) tile of (B*C, L); o_ref: (TR, 1); acc_ref: (TR, 1) f32."""
    li = pl.program_id(1)
    nl = pl.num_programs(1)

    @pl.when(li == 0)
    def _():
        acc_ref[...] = jnp.zeros_like(acc_ref)

    def _accumulate(vals):
        # Accumulate in f32 even for bf16 inputs.
        acc_ref[...] += jnp.sum(vals, axis=-1, keepdims=True, dtype=jnp.float32)

    if rem == 0:
        # Every L-tile is full: no masking needed.
        _accumulate(x_ref[...])
    else:
        # Ragged last L-tile: out-of-bounds lanes hold undefined data (could be
        # NaN/Inf) -> zero them before the sum.  Only the last step pays the mask.
        @pl.when(li < nl - 1)
        def _():
            _accumulate(x_ref[...])

        @pl.when(li == nl - 1)
        def _():
            x = x_ref[...]
            lane = jax.lax.broadcasted_iota(jnp.int32, x.shape, dimension=1)
            _accumulate(jnp.where(lane < rem, x, jnp.zeros_like(x)))

    @pl.when(li == nl - 1)
    def _():
        # Single multiply by the compile-time constant 1/L at finalize.
        o_ref[...] = (acc_ref[...] * inv_len).astype(o_ref.dtype)


def gap1d(x, *, target_block_bytes=8 * 1024 * 1024):
    """x: (B, C, L) -> (B, C). Equivalent to Flatten(AdaptiveAvgPool1d(1)(x))."""
    B, C, L = x.shape
    itemsize = jnp.dtype(x.dtype).itemsize

    # Collapse batch and channel into one row axis (free, row-major reshape).
    R = B * C
    x2 = x.reshape(R, L)

    # ---- Tile selection (budget with lane-padded sizes: VMEM pads L to 128) ----
    L_lanes = _round_up(L, _LANE)
    rows_in_budget = max(
        _SUBLANE, _round_down(target_block_bytes // (L_lanes * itemsize), _SUBLANE)
    )

    if R <= _SUBLANE:
        TR = R  # full-extent row block (allowed by the (8,128)/full-dim rule)
    else:
        half_rows = _round_up(pl.cdiv(R, 2), _SUBLANE)  # >= 2 row blocks (v7x megacore)
        TR = max(
            _SUBLANE,
            min(rows_in_budget, _round_down(R, _SUBLANE), half_rows, 4096),
        )

    slab_bytes = TR * L_lanes * itemsize
    if slab_bytes <= target_block_bytes:
        TL = L  # whole rows fit: contiguous row DMAs, single L step
    else:
        tl_cand = max(
            _LANE, _round_down(target_block_bytes // (TR * itemsize), _LANE)
        )
        TL = L if tl_cand >= L else tl_cand

    grid = (pl.cdiv(R, TR), pl.cdiv(L, TL))
    rem = L % TL

    kernel = functools.partial(_gap1d_kernel, inv_len=1.0 / L, rem=rem)

    # Bytes the kernel actually streams (boundary blocks read full tiles).
    read_bytes = grid[0] * TR * grid[1] * TL * itemsize
    write_bytes = R * itemsize

    out = pl.pallas_call(
        kernel,
        out_shape=jax.ShapeDtypeStruct((R, 1), x.dtype),
        grid_spec=pltpu.PrefetchScalarGridSpec(
            num_scalar_prefetch=0,
            grid=grid,
            in_specs=[pl.BlockSpec((TR, TL), lambda r, l: (r, l))],
            out_specs=pl.BlockSpec((TR, 1), lambda r, l: (r, 0)),
            scratch_shapes=[pltpu.VMEM((TR, 1), jnp.float32)],
        ),
        compiler_params=pltpu.CompilerParams(
            dimension_semantics=("parallel", "arbitrary"),
            vmem_limit_bytes=32 * 1024 * 1024,
        ),
        cost_estimate=pl.CostEstimate(
            flops=R * L + R,
            transcendentals=0,
            bytes_accessed=read_bytes + write_bytes,
        ),
    )(x2)

    return out.reshape(B, C)


if __name__ == "__main__":
    key = jax.random.PRNGKey(0)

    # Primary small-shape test (B, C, L) consistent with the module's forward.
    B, C, L = 2, 4, 16
    x = jax.random.normal(key, (B, C, L), dtype=jnp.float32)
    out = jax.block_until_ready(gap1d(x))
    ref = jnp.mean(x, axis=-1)
    assert out.shape == (B, C), out.shape
    assert jnp.allclose(out, ref, atol=1e-5, rtol=1e-5)

    # Unaligned rows (B*C not a multiple of 8) -> exercises the ragged row block.
    k1, k2 = jax.random.split(key)
    x2 = jax.random.normal(k1, (3, 5, 200), dtype=jnp.float32)
    out2 = jax.block_until_ready(gap1d(x2))
    assert jnp.allclose(out2, jnp.mean(x2, axis=-1), atol=1e-5, rtol=1e-5)

    # Force L tiling + ragged last L-tile (tiny block budget) -> exercises the
    # accumulator across L steps and the in-kernel lane mask.
    x3 = jax.random.normal(k2, (2, 3, 300), dtype=jnp.float32)
    out3 = jax.block_until_ready(gap1d(x3, target_block_bytes=4096))
    assert jnp.allclose(out3, jnp.mean(x3, axis=-1), atol=1e-5, rtol=1e-5)

    print("KERNEL_OK")
</pallas_src>

<mosaic_0001>
module attributes {stable_mosaic.version = 11 : i64} {
  func.func @_gap1d_kernel(%arg0: i32, %arg1: i32, %arg2: memref<8x16xf32, #tpu.memory_space<vmem>>, %arg3: memref<8x1xf32, #tpu.memory_space<vmem>>, %arg4: memref<8x1xf32, #tpu.memory_space<vmem>>) attributes {dimension_semantics = [#tpu.dimension_semantics<parallel>, #tpu.dimension_semantics<arbitrary>], iteration_bounds = array<i64: 1, 1>, scalar_prefetch = 0 : i64, scratch_operands = 1 : i64, tpu.core_type = #tpu.core_type<tc>, window_params = [{transform_indices = @transform_0, window_bounds = array<i64: 8, 16>}, {transform_indices = @transform_1, window_bounds = array<i64: 8, 1>}]} {
    %c0_i32 = arith.constant 0 : i32
    %0 = arith.cmpi eq, %arg1, %c0_i32 : i32
    %1 = arith.extui %0 : i1 to i32
    %c0_i32_0 = arith.constant 0 : i32
    %2 = arith.cmpi ne, %1, %c0_i32_0 : i32
    scf.if %2 {
      %cst_8 = arith.constant 0.000000e+00 : f32
      %12 = vector.broadcast %cst_8 : f32 to vector<8x1xf32>
      %c0_9 = arith.constant 0 : index
      %c0_10 = arith.constant 0 : index
      %13 = vector.load %arg4[%c0_9, %c0_10] : memref<8x1xf32, #tpu.memory_space<vmem>>, vector<8x1xf32>
      tpu.vector_store %arg4[%c0_9, %c0_10], %12 {strides = array<i32>} : memref<8x1xf32, #tpu.memory_space<vmem>>, vector<8x1xf32>,
    } else {
    }
    %c0 = arith.constant 0 : index
    %c0_1 = arith.constant 0 : index
    %3 = vector.load %arg2[%c0, %c0_1] : memref<8x16xf32, #tpu.memory_space<vmem>>, vector<8x16xf32>
    %c0_2 = arith.constant 0 : index
    %c0_3 = arith.constant 0 : index
    %4 = vector.load %arg4[%c0_2, %c0_3] : memref<8x1xf32, #tpu.memory_space<vmem>>, vector<8x1xf32>
    %cst = arith.constant dense<0.000000e+00> : vector<8xf32>
    %5 = vector.multi_reduction <add>, %3, %cst [1] : vector<8x16xf32> to vector<8xf32>
    %6 = vector.shape_cast %5 : vector<8xf32> to vector<8x1xf32>
    %7 = arith.addf %4, %6 : vector<8x1xf32>
    %c0_4 = arith.constant 0 : index
    %c0_5 = arith.constant 0 : index
    %8 = vector.load %arg4[%c0_4, %c0_5] : memref<8x1xf32, #tpu.memory_space<vmem>>, vector<8x1xf32>
    tpu.vector_store %arg4[%c0_4, %c0_5], %7 {strides = array<i32>} : memref<8x1xf32, #tpu.memory_space<vmem>>, vector<8x1xf32>,
    %c0_i32_6 = arith.constant 0 : i32
    %9 = arith.cmpi eq, %arg1, %c0_i32_6 : i32
    %10 = arith.extui %9 : i1 to i32
    %c0_i32_7 = arith.constant 0 : i32
    %11 = arith.cmpi ne, %10, %c0_i32_7 : i32
    scf.if %11 {
      %c0_8 = arith.constant 0 : index
      %c0_9 = arith.constant 0 : index
      %12 = vector.load %arg4[%c0_8, %c0_9] : memref<8x1xf32, #tpu.memory_space<vmem>>, vector<8x1xf32>
      %cst_10 = arith.constant 6.250000e-02 : f32
      %13 = vector.broadcast %cst_10 : f32 to vector<8x1xf32>
      %14 = arith.mulf %12, %13 : vector<8x1xf32>
      %c0_11 = arith.constant 0 : index
      %c0_12 = arith.constant 0 : index
      %15 = vector.load %arg3[%c0_11, %c0_12] : memref<8x1xf32, #tpu.memory_space<vmem>>, vector<8x1xf32>
      tpu.vector_store %arg3[%c0_11, %c0_12], %14 {strides = array<i32>} : memref<8x1xf32, #tpu.memory_space<vmem>>, vector<8x1xf32>,
    } else {
    }
    return
  }
  func.func @transform_0(%arg0: i32, %arg1: i32) -> (i32, i32) {
    %c0_i32 = arith.constant 0 : i32
    return %arg0, %arg1 : i32, i32
  }
  func.func @transform_1(%arg0: i32, %arg1: i32) -> (i32, i32) {
    %c0_i32 = arith.constant 0 : i32
    %c0_i32_0 = arith.constant 0 : i32
    return %arg0, %c0_i32 : i32, i32
  }
}

</mosaic_0001>

<llo_original>
// kernel: tpu_custom_call.1
$region0: #{tpu_custom_call.1}
  #allocation0 [shape = 'u32[]', space=smem, size = 0x4, offset = 0x4, fixed_abs, tag = 'smem constant byte address 0x4 - core index']
  #allocation1 [shape = 'u32[144,128]{1,0:T(1,128)}', space=vmem, size = 0x12000, scoped, tag = 'internal scratch']
  #allocation2 [shape = 'f32[8,1]{1,0:T(8,128)}', space=vmem, size = 0x1000, scoped, tag = 'scratch operand']
  %s0 = inlined_call_operand.hbm [shape: f32[8,16], index: 0, kind: input, shape index: {}]
  %s1 = inlined_call_operand.vmem [shape: f32[8,1], index: 1, kind: output, shape index: {}]
  %s2 = sld [smem:[#allocation0]]
  $region26: #{tpu_custom_call.1} parent=0
    _
  %s4 = ssub.s32 1, %s2
  %s5 = scalar_select 0, %s4, %s2
  $region1: #{tpu_custom_call.1} parent=0
    #allocation3 [shape = 'u8[4096]{0}', space=vmem, size = 0x1000, scoped, tag = 'input window, operand 0, single buffered']
    #allocation4 [shape = 's32[1]{0}', space=sflag, size = 0x4, scoped, tag = 'scoped memory for tpu_custom_call.1']
    %6 = vsyncpa [#allocation4], 0
    // Predicated region
    $region2: #{tpu_custom_call.1} parent=1 // pred_check
      _
    $region3: #{tpu_custom_call.1} parent=1 // pred_check_branch
      %8 = sbr.rel (0) target = $region5
    $region4: #{tpu_custom_call.1} parent=1 // pred_region
      %s10 = ssub.s32 128, 128
      %11 = vsyncadd [#allocation4], %s10
      %s13 = sshll.u32 [#allocation3], 4
      %s14 = int_to_ptr.vmem [resolvable:$true] %s13
      %16 = dma.hbm_to_vmem [thread:$0]  %s0, 128, %s14, [#allocation4]
    $region5: #{tpu_custom_call.1} parent=1 // pred_fallthru
      _
    // Predicated region
    $region6: #{tpu_custom_call.1} parent=1 // pred_check
      _
    $region7: #{tpu_custom_call.1} parent=1 // pred_check_branch
      %18 = sbr.rel (0) target = $region9
    $region8: #{tpu_custom_call.1} parent=1 // pred_region
      %19 = dma.done [#allocation4], 128
    $region9: #{tpu_custom_call.1} parent=1 // pred_fallthru
      _
    %p20 = scmp.eq.s32.totalorder 0, 0
    // Predicated region
    $region10: #{tpu_custom_call.1} parent=1 // pred_check
      %p21 = pneg %p20
    $region11: #{tpu_custom_call.1} parent=1 // pred_check_branch
      %23 = sbr.rel (%p21) target = $region13
    $region12: #{tpu_custom_call.1} parent=1 // pred_region
      %vm24 = vcmask 7168
      %25 = vst.msk [vmem:[#allocation2] sm:$0xff] %vm24, 0.0
    $region13: #{tpu_custom_call.1} parent=1 // pred_fallthru
      _
    %v26 = vld [vmem:[#allocation3] sm:$0xff]
    %v27 = vld [vmem:[#allocation2] sm:$0xff]
    %vm28 = vcmask 130048
    %v29 = vsel %vm28, %v26, 0.0
    %30 = vadd.xlane.f32.xlu0 %v29
    %v31 = vpop.xlane.xlu0 %30
    %v32 = vadd.f32 %v27, %v31
    %vm33 = vcmask 7168
    %34 = vst.msk [vmem:[#allocation2] sm:$0xff] %vm33, %v32
    // Predicated region
    $region14: #{tpu_custom_call.1} parent=1 // pred_check
      %p35 = pneg %p20
    $region15: #{tpu_custom_call.1} parent=1 // pred_check_branch
      %37 = sbr.rel (%p35) target = $region17
    $region16: #{tpu_custom_call.1} parent=1 // pred_region
      %v38 = vld [vmem:[#allocation2] sm:$0xff]
      %v39 = vmul.f32 %v38, 0.0625
      %40 = vst.msk [vmem:[%s1] sm:$0xff] %vm33, %v39
    $region17: #{tpu_custom_call.1} parent=1 // pred_fallthru
      _
    // Predicated region
    $region18: #{tpu_custom_call.1} parent=1 // pred_check
      _
    $region19: #{tpu_custom_call.1} parent=1 // pred_check_branch
      %42 = sbr.rel (0) target = $region21
    $region20: #{tpu_custom_call.1} parent=1 // pred_region
      _
    $region21: #{tpu_custom_call.1} parent=1 // pred_fallthru
      _
    // Predicated region
    $region22: #{tpu_custom_call.1} parent=1 // pred_check
      _
    $region23: #{tpu_custom_call.1} parent=1 // pred_check_branch
      %44 = sbr.rel (0) target = $region25
    $region24: #{tpu_custom_call.1} parent=1 // pred_region
      _
    $region25: #{tpu_custom_call.1} parent=1 // pred_fallthru
      _
    %45 = vsyncpa [#allocation4], 1

</llo_original>
